<compile_context>
chip_gen: v7x
topology: tpu7x:2x2x1
jax: 0.10.0
libtpu: 0.0.40
codegen_flags: <defaults>
</compile_context>

<pallas_src>
import math

import jax
import jax.numpy as jnp
from jax.experimental import pallas as pl
from jax.experimental.pallas import tpu as pltpu

_TAN_PI_8 = 0.4142135623730950
_PI = math.pi
_PI_2 = math.pi / 2
_PI_4 = math.pi / 4


def _atan2_kernel(y_ref, x_ref, o_ref):
    # y_ref/x_ref/o_ref blocks: (rb, cols) dense f32 slabs.
    y = y_ref[...]          # sin channel
    x = x_ref[...]          # cos channel

    a = jnp.abs(y)
    b = jnp.abs(x)
    mx = jnp.maximum(a, b)
    mn = jnp.minimum(a, b)

    # --- range reduction with a single reciprocal -------------------------
    # r = mn/mx in [0,1]; if r > tan(pi/8) use (r-1)/(r+1) = (mn-mx)/(mn+mx).
    big = mn > jnp.float32(_TAN_PI_8) * mx
    num = jnp.where(big, mn - mx, mn)
    den = jnp.where(big, mn + mx, mx)
    den = jnp.where(den == 0.0, jnp.float32(1.0), den)   # folds the 0/0 guard
    rr = num * pl.reciprocal(den)                        # one EUP op, full prec.

    # --- Cephes atanf core on rr in (-tan(pi/8), tan(pi/8)] ---------------
    z = rr * rr
    poly = (((8.05374449538e-2 * z - 1.38776856032e-1) * z
             + 1.99777106478e-1) * z - 3.33329491539e-1) * z * rr + rr
    ang = poly + jnp.where(big, jnp.float32(_PI_4), jnp.float32(0.0))

    # --- octant / quadrant fix-ups -----------------------------------------
    ang = jnp.where(a > b, jnp.float32(_PI_2) - ang, ang)   # |y| > |x|
    ang = jnp.where(x < 0.0, jnp.float32(_PI) - ang, ang)   # left half-plane
    ang = jnp.where(y < 0.0, -ang, ang)                     # sign of y

    o_ref[...] = ang


def sincos_to_angle(x, *, block_rows=256, block_cols=1024):
    """x: (N, 2) float32 -> (N,) float32, equal to atan2(x[:, 0], x[:, 1])."""
    assert x.ndim == 2 and x.shape[1] == 2
    n = x.shape[0]

    cols = block_cols                                   # lane axis, mult of 128
    rows_needed = pl.cdiv(n, cols)
    rb = min(block_rows, pl.cdiv(rows_needed, 8) * 8)   # sublane multiple of 8
    rows = pl.cdiv(rows_needed, rb) * rb                # total rows, mult of rb
    n_pad = rows * cols

    # Deinterleave (the only pre-pass), pad with zeros (atan2(0,0)=0 here),
    # and reshape each channel to a lane/sublane-dense 2D slab.
    sin = jnp.pad(x[:, 0], (0, n_pad - n)).reshape(rows, cols)
    cos = jnp.pad(x[:, 1], (0, n_pad - n)).reshape(rows, cols)

    out = pl.pallas_call(
        _atan2_kernel,
        out_shape=jax.ShapeDtypeStruct((rows, cols), x.dtype),
        grid_spec=pl.GridSpec(
            grid=(rows // rb,),
            in_specs=[pl.BlockSpec((rb, cols), lambda i: (i, 0)),
                      pl.BlockSpec((rb, cols), lambda i: (i, 0))],
            out_specs=pl.BlockSpec((rb, cols), lambda i: (i, 0)),
        ),
        compiler_params=pltpu.CompilerParams(
            dimension_semantics=("parallel",)),
    )(sin, cos)

    return out.reshape(-1)[:n]


if __name__ == "__main__":
    key = jax.random.PRNGKey(0)

    # Small batch of (sin, cos)-like pairs, consistent with the module's
    # expected (N, 2) regressor output.
    n = 16
    raw = jax.random.normal(key, (n, 2), dtype=jnp.float32)
    got = jax.block_until_ready(sincos_to_angle(raw))
    ref = jnp.arctan2(raw[:, 0], raw[:, 1])
    assert got.shape == (n,)
    assert jnp.allclose(got, ref, atol=1e-5), (got, ref)

    # Slightly larger case that exercises a multi-step (parallel) grid.
    n2 = 20000
    raw2 = jax.random.normal(jax.random.PRNGKey(1), (n2, 2), dtype=jnp.float32)
    got2 = jax.block_until_ready(sincos_to_angle(raw2, block_rows=8))
    ref2 = jnp.arctan2(raw2[:, 0], raw2[:, 1])
    assert got2.shape == (n2,)
    assert jnp.allclose(got2, ref2, atol=1e-5)

    print("KERNEL_OK")
</pallas_src>

<mosaic_0001>
module attributes {stable_mosaic.version = 11 : i64} {
  func.func @_atan2_kernel(%arg0: i32, %arg1: memref<8x1024xf32, #tpu.memory_space<vmem>>, %arg2: memref<8x1024xf32, #tpu.memory_space<vmem>>, %arg3: memref<8x1024xf32, #tpu.memory_space<vmem>>) attributes {dimension_semantics = [#tpu.dimension_semantics<parallel>], iteration_bounds = array<i64: 1>, scalar_prefetch = 0 : i64, scratch_operands = 0 : i64, tpu.core_type = #tpu.core_type<tc>, window_params = [{transform_indices = @transform_0, window_bounds = array<i64: 8, 1024>}, {transform_indices = @transform_1, window_bounds = array<i64: 8, 1024>}, {transform_indices = @transform_2, window_bounds = array<i64: 8, 1024>}]} {
    %c0 = arith.constant 0 : index
    %c0_0 = arith.constant 0 : index
    %0 = vector.load %arg1[%c0, %c0_0] : memref<8x1024xf32, #tpu.memory_space<vmem>>, vector<8x1024xf32>
    %c0_1 = arith.constant 0 : index
    %c0_2 = arith.constant 0 : index
    %1 = vector.load %arg2[%c0_1, %c0_2] : memref<8x1024xf32, #tpu.memory_space<vmem>>, vector<8x1024xf32>
    %2 = math.absf %0 : vector<8x1024xf32>
    %3 = math.absf %1 : vector<8x1024xf32>
    %4 = arith.maximumf %2, %3 : vector<8x1024xf32>
    %5 = arith.minimumf %2, %3 : vector<8x1024xf32>
    %cst = arith.constant 0.414213568 : f32
    %6 = vector.broadcast %cst : f32 to vector<8x1024xf32>
    %7 = arith.mulf %6, %4 : vector<8x1024xf32>
    %8 = arith.cmpf ogt, %5, %7 : vector<8x1024xf32>
    %9 = arith.subf %5, %4 : vector<8x1024xf32>
    %10 = arith.select %8, %9, %5 : vector<8x1024xi1>, vector<8x1024xf32>
    %11 = arith.addf %5, %4 : vector<8x1024xf32>
    %12 = arith.select %8, %11, %4 : vector<8x1024xi1>, vector<8x1024xf32>
    %cst_3 = arith.constant 0.000000e+00 : f32
    %13 = vector.broadcast %cst_3 : f32 to vector<8x1024xf32>
    %14 = arith.cmpf oeq, %12, %13 : vector<8x1024xf32>
    %cst_4 = arith.constant 1.000000e+00 : f32
    %15 = vector.broadcast %cst_4 : f32 to vector<8x1024xf32>
    %16 = arith.select %14, %15, %12 : vector<8x1024xi1>, vector<8x1024xf32>
    %17 = tpu.reciprocal %16 : vector<8x1024xf32> -> vector<8x1024xf32>
    %18 = arith.mulf %10, %17 : vector<8x1024xf32>
    %19 = arith.mulf %18, %18 : vector<8x1024xf32>
    %cst_5 = arith.constant 0.0805374458 : f32
    %20 = vector.broadcast %cst_5 : f32 to vector<8x1024xf32>
    %21 = arith.mulf %20, %19 : vector<8x1024xf32>
    %cst_6 = arith.constant 0.138776854 : f32
    %22 = vector.broadcast %cst_6 : f32 to vector<8x1024xf32>
    %23 = arith.subf %21, %22 : vector<8x1024xf32>
    %24 = arith.mulf %23, %19 : vector<8x1024xf32>
    %cst_7 = arith.constant 0.199777111 : f32
    %25 = vector.broadcast %cst_7 : f32 to vector<8x1024xf32>
    %26 = arith.addf %24, %25 : vector<8x1024xf32>
    %27 = arith.mulf %26, %19 : vector<8x1024xf32>
    %cst_8 = arith.constant 0.333329499 : f32
    %28 = vector.broadcast %cst_8 : f32 to vector<8x1024xf32>
    %29 = arith.subf %27, %28 : vector<8x1024xf32>
    %30 = arith.mulf %29, %19 : vector<8x1024xf32>
    %31 = arith.mulf %30, %18 : vector<8x1024xf32>
    %32 = arith.addf %31, %18 : vector<8x1024xf32>
    %cst_9 = arith.constant 0.785398185 : f32
    %cst_10 = arith.constant 0.000000e+00 : f32
    %33 = vector.broadcast %cst_9 : f32 to vector<8x1024xf32>
    %34 = vector.broadcast %cst_10 : f32 to vector<8x1024xf32>
    %35 = arith.select %8, %33, %34 : vector<8x1024xi1>, vector<8x1024xf32>
    %36 = arith.addf %32, %35 : vector<8x1024xf32>
    %37 = arith.cmpf ogt, %2, %3 : vector<8x1024xf32>
    %cst_11 = arith.constant 1.57079637 : f32
    %38 = vector.broadcast %cst_11 : f32 to vector<8x1024xf32>
    %39 = arith.subf %38, %36 : vector<8x1024xf32>
    %40 = arith.select %37, %39, %36 : vector<8x1024xi1>, vector<8x1024xf32>
    %cst_12 = arith.constant 0.000000e+00 : f32
    %41 = vector.broadcast %cst_12 : f32 to vector<8x1024xf32>
    %42 = arith.cmpf olt, %1, %41 : vector<8x1024xf32>
    %cst_13 = arith.constant 3.14159274 : f32
    %43 = vector.broadcast %cst_13 : f32 to vector<8x1024xf32>
    %44 = arith.subf %43, %40 : vector<8x1024xf32>
    %45 = arith.select %42, %44, %40 : vector<8x1024xi1>, vector<8x1024xf32>
    %cst_14 = arith.constant 0.000000e+00 : f32
    %46 = vector.broadcast %cst_14 : f32 to vector<8x1024xf32>
    %47 = arith.cmpf olt, %0, %46 : vector<8x1024xf32>
    %cst_15 = arith.constant 0.000000e+00 : f32
    %48 = vector.broadcast %cst_15 : f32 to vector<8x1024xf32>
    %49 = arith.subf %48, %45 : vector<8x1024xf32>
    %50 = arith.select %47, %49, %45 : vector<8x1024xi1>, vector<8x1024xf32>
    %c0_16 = arith.constant 0 : index
    %c0_17 = arith.constant 0 : index
    %51 = vector.load %arg3[%c0_16, %c0_17] : memref<8x1024xf32, #tpu.memory_space<vmem>>, vector<8x1024xf32>
    tpu.vector_store %arg3[%c0_16, %c0_17], %50 {strides = array<i32>} : memref<8x1024xf32, #tpu.memory_space<vmem>>, vector<8x1024xf32>,
    return
  }
  func.func @transform_0(%arg0: i32) -> (i32, i32) {
    %c0_i32 = arith.constant 0 : i32
    %c0_i32_0 = arith.constant 0 : i32
    return %arg0, %c0_i32 : i32, i32
  }
  func.func @transform_1(%arg0: i32) -> (i32, i32) {
    %c0_i32 = arith.constant 0 : i32
    %c0_i32_0 = arith.constant 0 : i32
    return %arg0, %c0_i32 : i32, i32
  }
  func.func @transform_2(%arg0: i32) -> (i32, i32) {
    %c0_i32 = arith.constant 0 : i32
    %c0_i32_0 = arith.constant 0 : i32
    return %arg0, %c0_i32 : i32, i32
  }
}

</mosaic_0001>

<llo_original>
// kernel: tpu_custom_call.1
$region0: #{tpu_custom_call.1}
  #allocation0 [shape = 'u32[]', space=smem, size = 0x4, offset = 0x4, fixed_abs, tag = 'smem constant byte address 0x4 - core index']
  #allocation1 [shape = 'u32[144,128]{1,0:T(1,128)}', space=vmem, size = 0x12000, scoped, tag = 'internal scratch']
  %s0 = inlined_call_operand.hbm [shape: f32[8,1024], index: 0, kind: input, shape index: {}]
  %s1 = inlined_call_operand.hbm [shape: f32[8,1024], index: 1, kind: input, shape index: {}]
  %s2 = inlined_call_operand.hbm [shape: f32[8,1024], index: 2, kind: output, shape index: {}]
  %s3 = sld [smem:[#allocation0]]
  $region26: #{tpu_custom_call.1} parent=0
    _
  %s5 = ssub.s32 1, %s3
  %s6 = scalar_select 0, %s5, %s3
  $region1: #{tpu_custom_call.1} parent=0
    #allocation2 [shape = 'u8[32768]{0}', space=vmem, size = 0x8000, scoped, tag = 'input window, operand 0, single buffered']
    #allocation3 [shape = 's32[1]{0}', space=sflag, size = 0x4, scoped, tag = 'scoped memory for tpu_custom_call.1']
    #allocation4 [shape = 's32[1]{0}', space=sflag, size = 0x4, scoped, tag = 'scoped memory for tpu_custom_call.1']
    #allocation5 [shape = 'u8[32768]{0}', space=vmem, size = 0x8000, scoped, tag = 'input window, operand 1, single buffered']
    #allocation6 [shape = 's32[1]{0}', space=sflag, size = 0x4, scoped, tag = 'scoped memory for tpu_custom_call.1']
    #allocation7 [shape = 'u8[32768]{0}', space=vmem, size = 0x8000, scoped, tag = 'output window, operand 0, single buffered']
    %7 = vsyncpa [#allocation3], 0
    %8 = vsyncpa [#allocation6], 0
    %9 = vsyncpa [#allocation4], 0
    // Predicated region
    $region2: #{tpu_custom_call.1} parent=1 // pred_check
      _
    $region3: #{tpu_custom_call.1} parent=1 // pred_check_branch
      %11 = sbr.rel (0) target = $region5
    $region4: #{tpu_custom_call.1} parent=1 // pred_region
      %s13 = ssub.s32 1024, 1024
      %14 = vsyncadd [#allocation3], %s13
      %s16 = sshll.u32 [#allocation2], 4
      %s17 = int_to_ptr.vmem [resolvable:$true] %s16
      %19 = dma.hbm_to_vmem [thread:$0]  %s0, 1024, %s17, [#allocation3]
    $region5: #{tpu_custom_call.1} parent=1 // pred_fallthru
      _
    // Predicated region
    $region6: #{tpu_custom_call.1} parent=1 // pred_check
      _
    $region7: #{tpu_custom_call.1} parent=1 // pred_check_branch
      %21 = sbr.rel (0) target = $region9
    $region8: #{tpu_custom_call.1} parent=1 // pred_region
      %s23 = ssub.s32 1024, 1024
      %24 = vsyncadd [#allocation6], %s23
      %s26 = sshll.u32 [#allocation5], 4
      %s27 = int_to_ptr.vmem [resolvable:$true] %s26
      %29 = dma.hbm_to_vmem [thread:$0]  %s1, 1024, %s27, [#allocation6]
    $region9: #{tpu_custom_call.1} parent=1 // pred_fallthru
      _
    // Predicated region
    $region10: #{tpu_custom_call.1} parent=1 // pred_check
      _
    $region11: #{tpu_custom_call.1} parent=1 // pred_check_branch
      %31 = sbr.rel (0) target = $region13
    $region12: #{tpu_custom_call.1} parent=1 // pred_region
      %32 = dma.done [#allocation3], 1024
    $region13: #{tpu_custom_call.1} parent=1 // pred_fallthru
      _
    // Predicated region
    $region14: #{tpu_custom_call.1} parent=1 // pred_check
      _
    $region15: #{tpu_custom_call.1} parent=1 // pred_check_branch
      %34 = sbr.rel (0) target = $region17
    $region16: #{tpu_custom_call.1} parent=1 // pred_region
      %35 = dma.done [#allocation6], 1024
    $region17: #{tpu_custom_call.1} parent=1 // pred_fallthru
      _
    %v36 = vld [vmem:[#allocation2] sm:$0xff]
    %v37 = vld [vmem:[#allocation2 + $0x8] sm:$0xff]
    %v38 = vld [vmem:[#allocation2 + $0x10] sm:$0xff]
    %v39 = vld [vmem:[#allocation2 + $0x18] sm:$0xff]
    %v40 = vld [vmem:[#allocation2 + $0x20] sm:$0xff]
    %v41 = vld [vmem:[#allocation2 + $0x28] sm:$0xff]
    %v42 = vld [vmem:[#allocation2 + $0x30] sm:$0xff]
    %v43 = vld [vmem:[#allocation2 + $0x38] sm:$0xff]
    %v44 = vld [vmem:[#allocation5] sm:$0xff]
    %v45 = vld [vmem:[#allocation5 + $0x8] sm:$0xff]
    %v46 = vld [vmem:[#allocation5 + $0x10] sm:$0xff]
    %v47 = vld [vmem:[#allocation5 + $0x18] sm:$0xff]
    %v48 = vld [vmem:[#allocation5 + $0x20] sm:$0xff]
    %v49 = vld [vmem:[#allocation5 + $0x28] sm:$0xff]
    %v50 = vld [vmem:[#allocation5 + $0x30] sm:$0xff]
    %v51 = vld [vmem:[#allocation5 + $0x38] sm:$0xff]
    %v52 = vand.u32 2147483647, %v36
    %v53 = vand.u32 2147483647, %v37
    %v54 = vand.u32 2147483647, %v38
    %v55 = vand.u32 2147483647, %v39
    %v56 = vand.u32 2147483647, %v40
    %v57 = vand.u32 2147483647, %v41
    %v58 = vand.u32 2147483647, %v42
    %v59 = vand.u32 2147483647, %v43
    %v60 = vand.u32 2147483647, %v44
    %v61 = vand.u32 2147483647, %v45
    %v62 = vand.u32 2147483647, %v46
    %v63 = vand.u32 2147483647, %v47
    %v64 = vand.u32 2147483647, %v48
    %v65 = vand.u32 2147483647, %v49
    %v66 = vand.u32 2147483647, %v50
    %v67 = vand.u32 2147483647, %v51
    %v68 = vmax.f32 %v52, %v60
    %v69 = vmax.f32 %v53, %v61
    %v70 = vmax.f32 %v54, %v62
    %v71 = vmax.f32 %v55, %v63
    %v72 = vmax.f32 %v56, %v64
    %v73 = vmax.f32 %v57, %v65
    %v74 = vmax.f32 %v58, %v66
    %v75 = vmax.f32 %v59, %v67
    %v76 = vmin.f32 %v52, %v60
    %v77 = vmin.f32 %v53, %v61
    %v78 = vmin.f32 %v54, %v62
    %v79 = vmin.f32 %v55, %v63
    %v80 = vmin.f32 %v56, %v64
    %v81 = vmin.f32 %v57, %v65
    %v82 = vmin.f32 %v58, %v66
    %v83 = vmin.f32 %v59, %v67
    %v84 = vmul.f32 %v68, 0.41421357
    %v85 = vmul.f32 %v69, 0.41421357
    %v86 = vmul.f32 %v70, 0.41421357
    %v87 = vmul.f32 %v71, 0.41421357
    %v88 = vmul.f32 %v72, 0.41421357
    %v89 = vmul.f32 %v73, 0.41421357
    %v90 = vmul.f32 %v74, 0.41421357
    %v91 = vmul.f32 %v75, 0.41421357
    %vm92 = vcmp.gt.f32.partialorder %v76, %v84
    %vm93 = vcmp.gt.f32.partialorder %v77, %v85
    %vm94 = vcmp.gt.f32.partialorder %v78, %v86
    %vm95 = vcmp.gt.f32.partialorder %v79, %v87
    %vm96 = vcmp.gt.f32.partialorder %v80, %v88
    %vm97 = vcmp.gt.f32.partialorder %v81, %v89
    %vm98 = vcmp.gt.f32.partialorder %v82, %v90
    %vm99 = vcmp.gt.f32.partialorder %v83, %v91
    %v100 = vsub.f32 %v76, %v68
    %v101 = vsub.f32 %v77, %v69
    %v102 = vsub.f32 %v78, %v70
    %v103 = vsub.f32 %v79, %v71
    %v104 = vsub.f32 %v80, %v72
    %v105 = vsub.f32 %v81, %v73
    %v106 = vsub.f32 %v82, %v74
    %v107 = vsub.f32 %v83, %v75
    %v108 = vsel %vm92, %v100, %v76
    %v109 = vsel %vm93, %v101, %v77
    %v110 = vsel %vm94, %v102, %v78
    %v111 = vsel %vm95, %v103, %v79
    %v112 = vsel %vm96, %v104, %v80
    %v113 = vsel %vm97, %v105, %v81
    %v114 = vsel %vm98, %v106, %v82
    %v115 = vsel %vm99, %v107, %v83
    %v116 = vadd.f32 %v76, %v68
    %v117 = vadd.f32 %v77, %v69
    %v118 = vadd.f32 %v78, %v70
    %v119 = vadd.f32 %v79, %v71
    %v120 = vadd.f32 %v80, %v72
    %v121 = vadd.f32 %v81, %v73
    %v122 = vadd.f32 %v82, %v74
    %v123 = vadd.f32 %v83, %v75
    %v124 = vsel %vm92, %v116, %v68
    %v125 = vsel %vm93, %v117, %v69
    %v126 = vsel %vm94, %v118, %v70
    %v127 = vsel %vm95, %v119, %v71
    %v128 = vsel %vm96, %v120, %v72
    %v129 = vsel %vm97, %v121, %v73
    %v130 = vsel %vm98, %v122, %v74
    %v131 = vsel %vm99, %v123, %v75
    %vm132 = vcmp.eq.f32.partialorder %v124, 0.0
    %vm133 = vcmp.eq.f32.partialorder %v125, 0.0
    %vm134 = vcmp.eq.f32.partialorder %v126, 0.0
    %vm135 = vcmp.eq.f32.partialorder %v127, 0.0
    %vm136 = vcmp.eq.f32.partialorder %v128, 0.0
    %vm137 = vcmp.eq.f32.partialorder %v129, 0.0
    %vm138 = vcmp.eq.f32.partialorder %v130, 0.0
    %vm139 = vcmp.eq.f32.partialorder %v131, 0.0
    %v140 = vsel %vm132, 1.0, %v124
    %v141 = vsel %vm133, 1.0, %v125
    %v142 = vsel %vm134, 1.0, %v126
    %v143 = vsel %vm135, 1.0, %v127
    %v144 = vsel %vm136, 1.0, %v128
    %v145 = vsel %vm137, 1.0, %v129
    %v146 = vsel %vm138, 1.0, %v130
    %v147 = vsel %vm139, 1.0, %v131
    %v148 = vrcp.pop %v140
    %v149 = vrcp.pop %v141
    %v150 = vrcp.pop %v142
    %v151 = vrcp.pop %v143
    %v152 = vrcp.pop %v144
    %v153 = vrcp.pop %v145
    %v154 = vrcp.pop %v146
    %v155 = vrcp.pop %v147
    %v156 = vmul.f32 %v108, %v148
    %v157 = vmul.f32 %v109, %v149
    %v158 = vmul.f32 %v110, %v150
    %v159 = vmul.f32 %v111, %v151
    %v160 = vmul.f32 %v112, %v152
    %v161 = vmul.f32 %v113, %v153
    %v162 = vmul.f32 %v114, %v154
    %v163 = vmul.f32 %v115, %v155
    %v164 = vmul.f32 %v156, %v156
    %v165 = vmul.f32 %v157, %v157
    %v166 = vmul.f32 %v158, %v158
    %v167 = vmul.f32 %v159, %v159
    %v168 = vmul.f32 %v160, %v160
    %v169 = vmul.f32 %v161, %v161
    %v170 = vmul.f32 %v162, %v162
    %v171 = vmul.f32 %v163, %v163
    %v172 = vmul.f32 %v164, 0.080537446
    %v173 = vmul.f32 %v165, 0.080537446
    %v174 = vmul.f32 %v166, 0.080537446
    %v175 = vmul.f32 %v167, 0.080537446
    %v176 = vmul.f32 %v168, 0.080537446
    %v177 = vmul.f32 %v169, 0.080537446
    %v178 = vmul.f32 %v170, 0.080537446
    %v179 = vmul.f32 %v171, 0.080537446
    %v180 = vsub.f32 %v172, 0.13877685
    %v181 = vsub.f32 %v173, 0.13877685
    %v182 = vsub.f32 %v174, 0.13877685
    %v183 = vsub.f32 %v175, 0.13877685
    %v184 = vsub.f32 %v176, 0.13877685
    %v185 = vsub.f32 %v177, 0.13877685
    %v186 = vsub.f32 %v178, 0.13877685
    %v187 = vsub.f32 %v179, 0.13877685
    %v188 = vmul.f32 %v180, %v164
    %v189 = vmul.f32 %v181, %v165
    %v190 = vmul.f32 %v182, %v166
    %v191 = vmul.f32 %v183, %v167
    %v192 = vmul.f32 %v184, %v168
    %v193 = vmul.f32 %v185, %v169
    %v194 = vmul.f32 %v186, %v170
    %v195 = vmul.f32 %v187, %v171
    %v196 = vadd.f32 %v188, 0.19977711
    %v197 = vadd.f32 %v189, 0.19977711
    %v198 = vadd.f32 %v190, 0.19977711
    %v199 = vadd.f32 %v191, 0.19977711
    %v200 = vadd.f32 %v192, 0.19977711
    %v201 = vadd.f32 %v193, 0.19977711
    %v202 = vadd.f32 %v194, 0.19977711
    %v203 = vadd.f32 %v195, 0.19977711
    %v204 = vmul.f32 %v196, %v164
    %v205 = vmul.f32 %v197, %v165
    %v206 = vmul.f32 %v198, %v166
    %v207 = vmul.f32 %v199, %v167
    %v208 = vmul.f32 %v200, %v168
    %v209 = vmul.f32 %v201, %v169
    %v210 = vmul.f32 %v202, %v170
    %v211 = vmul.f32 %v203, %v171
    %v212 = vsub.f32 %v204, 0.3333295
    %v213 = vsub.f32 %v205, 0.3333295
    %v214 = vsub.f32 %v206, 0.3333295
    %v215 = vsub.f32 %v207, 0.3333295
    %v216 = vsub.f32 %v208, 0.3333295
    %v217 = vsub.f32 %v209, 0.3333295
    %v218 = vsub.f32 %v210, 0.3333295
    %v219 = vsub.f32 %v211, 0.3333295
    %v220 = vmul.f32 %v212, %v164
    %v221 = vmul.f32 %v213, %v165
    %v222 = vmul.f32 %v214, %v166
    %v223 = vmul.f32 %v215, %v167
    %v224 = vmul.f32 %v216, %v168
    %v225 = vmul.f32 %v217, %v169
    %v226 = vmul.f32 %v218, %v170
    %v227 = vmul.f32 %v219, %v171
    %v228 = vmul.f32 %v220, %v156
    %v229 = vmul.f32 %v221, %v157
    %v230 = vmul.f32 %v222, %v158
    %v231 = vmul.f32 %v223, %v159
    %v232 = vmul.f32 %v224, %v160
    %v233 = vmul.f32 %v225, %v161
    %v234 = vmul.f32 %v226, %v162
    %v235 = vmul.f32 %v227, %v163
    %v236 = vadd.f32 %v228, %v156
    %v237 = vadd.f32 %v229, %v157
    %v238 = vadd.f32 %v230, %v158
    %v239 = vadd.f32 %v231, %v159
    %v240 = vadd.f32 %v232, %v160
    %v241 = vadd.f32 %v233, %v161
    %v242 = vadd.f32 %v234, %v162
    %v243 = vadd.f32 %v235, %v163
    %v244 = vsel %vm92, 0.7853982, 0.0
    %v245 = vsel %vm93, 0.7853982, 0.0
    %v246 = vsel %vm94, 0.7853982, 0.0
    %v247 = vsel %vm95, 0.7853982, 0.0
    %v248 = vsel %vm96, 0.7853982, 0.0
    %v249 = vsel %vm97, 0.7853982, 0.0
    %v250 = vsel %vm98, 0.7853982, 0.0
    %v251 = vsel %vm99, 0.7853982, 0.0
    %v252 = vadd.f32 %v236, %v244
    %v253 = vadd.f32 %v237, %v245
    %v254 = vadd.f32 %v238, %v246
    %v255 = vadd.f32 %v239, %v247
    %v256 = vadd.f32 %v240, %v248
    %v257 = vadd.f32 %v241, %v249
    %v258 = vadd.f32 %v242, %v250
    %v259 = vadd.f32 %v243, %v251
    %vm260 = vcmp.gt.f32.partialorder %v52, %v60
    %vm261 = vcmp.gt.f32.partialorder %v53, %v61
    %vm262 = vcmp.gt.f32.partialorder %v54, %v62
    %vm263 = vcmp.gt.f32.partialorder %v55, %v63
    %vm264 = vcmp.gt.f32.partialorder %v56, %v64
    %vm265 = vcmp.gt.f32.partialorder %v57, %v65
    %vm266 = vcmp.gt.f32.partialorder %v58, %v66
    %vm267 = vcmp.gt.f32.partialorder %v59, %v67
    %v268 = vsub.f32 1.5707964, %v252
    %v269 = vsub.f32 1.5707964, %v253
    %v270 = vsub.f32 1.5707964, %v254
    %v271 = vsub.f32 1.5707964, %v255
    %v272 = vsub.f32 1.5707964, %v256
    %v273 = vsub.f32 1.5707964, %v257
    %v274 = vsub.f32 1.5707964, %v258
    %v275 = vsub.f32 1.5707964, %v259
    %v276 = vsel %vm260, %v268, %v252
    %v277 = vsel %vm261, %v269, %v253
    %v278 = vsel %vm262, %v270, %v254
    %v279 = vsel %vm263, %v271, %v255
    %v280 = vsel %vm264, %v272, %v256
    %v281 = vsel %vm265, %v273, %v257
    %v282 = vsel %vm266, %v274, %v258
    %v283 = vsel %vm267, %v275, %v259
    %vm284 = vcmp.lt.f32.partialorder %v44, 0.0
    %vm285 = vcmp.lt.f32.partialorder %v45, 0.0
    %vm286 = vcmp.lt.f32.partialorder %v46, 0.0
    %vm287 = vcmp.lt.f32.partialorder %v47, 0.0
    %vm288 = vcmp.lt.f32.partialorder %v48, 0.0
    %vm289 = vcmp.lt.f32.partialorder %v49, 0.0
    %vm290 = vcmp.lt.f32.partialorder %v50, 0.0
    %vm291 = vcmp.lt.f32.partialorder %v51, 0.0
    %v292 = vsub.f32 3.1415927, %v276
    %v293 = vsub.f32 3.1415927, %v277
    %v294 = vsub.f32 3.1415927, %v278
    %v295 = vsub.f32 3.1415927, %v279
    %v296 = vsub.f32 3.1415927, %v280
    %v297 = vsub.f32 3.1415927, %v281
    %v298 = vsub.f32 3.1415927, %v282
    %v299 = vsub.f32 3.1415927, %v283
    %v300 = vsel %vm284, %v292, %v276
    %v301 = vsel %vm285, %v293, %v277
    %v302 = vsel %vm286, %v294, %v278
    %v303 = vsel %vm287, %v295, %v279
    %v304 = vsel %vm288, %v296, %v280
    %v305 = vsel %vm289, %v297, %v281
    %v306 = vsel %vm290, %v298, %v282
    %v307 = vsel %vm291, %v299, %v283
    %vm308 = vcmp.lt.f32.partialorder %v36, 0.0
    %vm309 = vcmp.lt.f32.partialorder %v37, 0.0
    %vm310 = vcmp.lt.f32.partialorder %v38, 0.0
    %vm311 = vcmp.lt.f32.partialorder %v39, 0.0
    %vm312 = vcmp.lt.f32.partialorder %v40, 0.0
    %vm313 = vcmp.lt.f32.partialorder %v41, 0.0
    %vm314 = vcmp.lt.f32.partialorder %v42, 0.0
    %vm315 = vcmp.lt.f32.partialorder %v43, 0.0
    %v316 = vsub.f32 0.0, %v300
    %v317 = vsub.f32 0.0, %v301
    %v318 = vsub.f32 0.0, %v302
    %v319 = vsub.f32 0.0, %v303
    %v320 = vsub.f32 0.0, %v304
    %v321 = vsub.f32 0.0, %v305
    %v322 = vsub.f32 0.0, %v306
    %v323 = vsub.f32 0.0, %v307
    %v324 = vsel %vm308, %v316, %v300
    %v325 = vsel %vm309, %v317, %v301
    %v326 = vsel %vm310, %v318, %v302
    %v327 = vsel %vm311, %v319, %v303
    %v328 = vsel %vm312, %v320, %v304
    %v329 = vsel %vm313, %v321, %v305
    %v330 = vsel %vm314, %v322, %v306
    %v331 = vsel %vm315, %v323, %v307
    %332 = vst [vmem:[#allocation7] sm:$0xff] %v324
    %333 = vst [vmem:[#allocation7 + $0x8] sm:$0xff] %v325
    %334 = vst [vmem:[#allocation7 + $0x10] sm:$0xff] %v326
    %335 = vst [vmem:[#allocation7 + $0x18] sm:$0xff] %v327
    %336 = vst [vmem:[#allocation7 + $0x20] sm:$0xff] %v328
    %337 = vst [vmem:[#allocation7 + $0x28] sm:$0xff] %v329
    %338 = vst [vmem:[#allocation7 + $0x30] sm:$0xff] %v330
    %339 = vst [vmem:[#allocation7 + $0x38] sm:$0xff] %v331
    // Predicated region
    $region18: #{tpu_custom_call.1} parent=1 // pred_check
      _
    $region19: #{tpu_custom_call.1} parent=1 // pred_check_branch
      %341 = sbr.rel (0) target = $region21
    $region20: #{tpu_custom_call.1} parent=1 // pred_region
      %s343 = ssub.s32 1024, 1024
      %344 = vsyncadd [#allocation4], %s343
      %s346 = sshll.u32 [#allocation7], 4
      %s347 = int_to_ptr.vmem [resolvable:$true] %s346
      %349 = dma.vmem_to_hbm [thread:$0]  %s347, 1024, %s2, [#allocation4]
    $region21: #{tpu_custom_call.1} parent=1 // pred_fallthru
      _
    // Predicated region
    $region22: #{tpu_custom_call.1} parent=1 // pred_check
      _
    $region23: #{tpu_custom_call.1} parent=1 // pred_check_branch
      %351 = sbr.rel (0) target = $region25
    $region24: #{tpu_custom_call.1} parent=1 // pred_region
      %352 = dma.done [#allocation4], 1024
    $region25: #{tpu_custom_call.1} parent=1 // pred_fallthru
      _
    %353 = vsyncpa [#allocation3], 1
    %354 = vsyncpa [#allocation6], 1
    %355 = vsyncpa [#allocation4], 1

</llo_original>
